<compile_context>
chip_gen: v5e
topology: v5e:2x2
jax: 0.10.0
libtpu: 0.0.40
codegen_flags: <defaults>
</compile_context>

<pallas_src>
import functools

import jax
import jax.numpy as jnp
from jax import lax
from jax.experimental import pallas as pl
from jax.experimental.pallas import tpu as pltpu


def recurnet_kernel(doc_ref, w_ih_ref, w_hh_ref, b_ref, w_lin_ref, b_lin_ref,
                    out_ref, *, seq_len, batch_pad):
    """LSTM over time (hoisted input projection), then linear + softmax.

    doc_ref   : [T*Bp, E]   bf16, time-major rows (row t*Bp+b is step t, batch b)
    w_ih_ref  : [E, 4H]     bf16 (weight_ih_l0 transposed; gate order f,i,g,o)
    w_hh_ref  : [H, 4H]     bf16 (weight_hh_l0 transposed; gate order f,i,g,o)
    b_ref     : [1, 4H]     f32  (bias_ih_l0 + bias_hh_l0, gate order f,i,g,o)
    w_lin_ref : [H, 128]    bf16 (linear.weight transposed, zero-padded lanes)
    b_lin_ref : [1, 128]    f32  (linear.bias padded with -1e30 on pad lanes)
    out_ref   : [Bp, 128]   f32  softmax probabilities (pad lanes exactly 0)
    """
    H = w_hh_ref.shape[0]
    G = 4 * H                                                   # 128 lanes

    # Hoisted input projection: ONE MXU call for all timesteps (bf16 in, f32 acc).
    gates_x = (jnp.dot(doc_ref[...], w_ih_ref[...],
                       preferred_element_type=jnp.float32)
               + b_ref[...])                                    # [T*Bp, 4H] f32

    # (1) Single-EUP-pass nonlinearity: tanh(x) = 2*sigmoid(2x) - 1.
    # Only the candidate gate 'g' (lanes [2H, 3H)) uses tanh; others sigmoid.
    lane = lax.broadcasted_iota(jnp.int32, (batch_pad, G), 1)
    is_g = jnp.logical_and(lane >= 2 * H, lane < 3 * H)
    gmul = jnp.where(is_g, 2.0, 1.0).astype(jnp.float32)        # pre-scale == post-mul
    gadd = jnp.where(is_g, -1.0, 0.0).astype(jnp.float32)

    w_hh = w_hh_ref[...]                                        # loop-invariant bf16
    h = jnp.zeros((batch_pad, H), jnp.float32)
    c = jnp.zeros((batch_pad, H), jnp.float32)

    # Fully unrolled recurrence (T static & small); only h@W_hh + the gate
    # elementwise chain remain on the serial critical path. Row slices are
    # 8-sublane aligned (Bp == 8).
    for t in range(seq_len):
        g_x = gates_x[t * batch_pad:(t + 1) * batch_pad, :]     # [Bp, 4H]
        gates = g_x + jnp.dot(h.astype(jnp.bfloat16), w_hh,     # (2) bf16 MXU
                              preferred_element_type=jnp.float32)
        act = jax.nn.sigmoid(gates * gmul) * gmul + gadd        # one EUP pass
        # (3) gate order f,i,g,o: f (needed first, for f*c) at lane offset 0.
        f_g = act[:, 0 * H:1 * H]
        i_g = act[:, 1 * H:2 * H]
        g_g = act[:, 2 * H:3 * H]
        o_g = act[:, 3 * H:4 * H]
        c = f_g * c + i_g * g_g
        h = o_g * jnp.tanh(c)

    # dropout(p=0.0) -> identity.  Linear + softmax on a lane-dense [Bp,128]
    # block (pad lanes get bias -1e30 -> exp()==0, so the real softmax is exact).
    logits = (jnp.dot(h.astype(jnp.bfloat16), w_lin_ref[...],
                      preferred_element_type=jnp.float32)
              + b_lin_ref[...])                                 # [Bp, 128] f32
    m = jnp.max(logits, axis=-1, keepdims=True)
    e = jnp.exp(logits - m)
    out_ref[...] = e / jnp.sum(e, axis=-1, keepdims=True)       # unmasked vst


def _reorder_gates(w):
    """Reorder PyTorch packed LSTM gate blocks (i,f,g,o) -> (f,i,g,o), axis 0."""
    H = w.shape[0] // 4
    return jnp.concatenate([w[H:2 * H], w[:H], w[2 * H:3 * H], w[3 * H:]], axis=0)


def init_params(key, embed_dim, hidden_dim, output_dim):
    """Deterministic init matching PyTorch's U(-1/sqrt(fan), 1/sqrt(fan)) scheme."""
    k_lstm = 1.0 / jnp.sqrt(jnp.float32(hidden_dim))
    k_lin = 1.0 / jnp.sqrt(jnp.float32(hidden_dim))
    ks = jax.random.split(key, 6)
    w_ih = jax.random.uniform(ks[0], (4 * hidden_dim, embed_dim),
                              jnp.float32, -k_lstm, k_lstm)
    w_hh = jax.random.uniform(ks[1], (4 * hidden_dim, hidden_dim),
                              jnp.float32, -k_lstm, k_lstm)
    b_ih = jax.random.uniform(ks[2], (4 * hidden_dim,),
                              jnp.float32, -k_lstm, k_lstm)
    b_hh = jax.random.uniform(ks[3], (4 * hidden_dim,),
                              jnp.float32, -k_lstm, k_lstm)
    w_lin = jax.random.uniform(ks[4], (output_dim, hidden_dim),
                               jnp.float32, -k_lin, k_lin)
    b_lin = jax.random.uniform(ks[5], (output_dim,),
                               jnp.float32, -k_lin, k_lin)
    return dict(w_ih=w_ih, w_hh=w_hh, b_ih=b_ih, b_hh=b_hh,
                w_lin=w_lin, b_lin=b_lin)


@jax.jit
def recurnet_forward(doc, params):
    """doc: [B, T, E] (batch_first, like the PyTorch module). Returns [B, O]."""
    B, T, E = doc.shape
    H = params["w_hh"].shape[1]
    O = params["w_lin"].shape[0]

    BP = 8                       # pad batch to one sublane tile
    OP = 128                     # pad output dim to one lane tile (lane-dense store)
    # TODO(synk): at production batch sizes, replace this assert with a batch
    # grid axis (grid=(ceil(B/Bt),), dimension_semantics=("parallel",)) so both
    # v7x TensorCores are used; also chunk gates_x over a time grid axis.
    assert B <= BP

    # Layout-only prep; under jit the transpose/pad/reshape/cast fuse into a
    # single XLA fusion (no compute is hoisted out of the kernel).
    doc_tbe = jnp.transpose(doc, (1, 0, 2))                        # [T, B, E]
    doc_tbe = jnp.pad(doc_tbe, ((0, 0), (0, BP - B), (0, 0)))      # [T, BP, E]
    doc_flat = doc_tbe.reshape(T * BP, E).astype(jnp.bfloat16)     # [T*BP, E]

    w_ih_t = _reorder_gates(params["w_ih"]).T.astype(jnp.bfloat16)   # [E, 4H]
    w_hh_t = _reorder_gates(params["w_hh"]).T.astype(jnp.bfloat16)   # [H, 4H]
    b = _reorder_gates(params["b_ih"] + params["b_hh"])[None, :]     # [1, 4H] f32
    b = b.astype(jnp.float32)
    w_lin_pad = jnp.pad(params["w_lin"].T,
                        ((0, 0), (0, OP - O))).astype(jnp.bfloat16)  # [H, OP]
    b_lin_pad = jnp.full((1, OP), -1e30, jnp.float32)
    b_lin_pad = b_lin_pad.at[0, :O].set(params["b_lin"])             # [1, OP]

    # Rough cost hints so XLA schedules the surrounding ops sensibly.
    flops = 2 * T * BP * E * 4 * H + T * 2 * BP * H * 4 * H + 2 * BP * H * OP
    trans = T * (BP * 4 * H + BP * H) + BP * OP
    bytes_acc = (2 * (doc_flat.size + w_ih_t.size + w_hh_t.size + w_lin_pad.size)
                 + 4 * (b.size + b_lin_pad.size + BP * OP))

    vmem = pl.BlockSpec(memory_space=pltpu.MemorySpace.VMEM)
    kernel = functools.partial(recurnet_kernel, seq_len=T, batch_pad=BP)
    out_pad = pl.pallas_call(
        kernel,
        out_shape=jax.ShapeDtypeStruct((BP, OP), jnp.float32),
        in_specs=[vmem] * 6,
        out_specs=vmem,
        compiler_params=pltpu.CompilerParams(vmem_limit_bytes=32 * 1024 * 1024),
        cost_estimate=pl.CostEstimate(flops=flops, transcendentals=trans,
                                      bytes_accessed=bytes_acc),
    )(doc_flat, w_ih_t, w_hh_t, b, w_lin_pad, b_lin_pad)
    return out_pad[:B, :O]


def recurnet_reference(doc, params):
    """Pure-JAX f32 reference mirroring the PyTorch forward (lstm path)."""
    B, T, _ = doc.shape
    H = params["w_hh"].shape[1]
    b = params["b_ih"] + params["b_hh"]
    h = jnp.zeros((B, H), jnp.float32)
    c = jnp.zeros((B, H), jnp.float32)
    for t in range(T):
        g = doc[:, t, :] @ params["w_ih"].T + h @ params["w_hh"].T + b
        i_g = jax.nn.sigmoid(g[:, 0 * H:1 * H])
        f_g = jax.nn.sigmoid(g[:, 1 * H:2 * H])
        g_g = jnp.tanh(g[:, 2 * H:3 * H])
        o_g = jax.nn.sigmoid(g[:, 3 * H:4 * H])
        c = f_g * c + i_g * g_g
        h = o_g * jnp.tanh(c)
    logits = h @ params["w_lin"].T + params["b_lin"]
    return jax.nn.softmax(logits, axis=1)


if __name__ == "__main__":
    # Small shapes: batch=2, seq=8, embedding_dim=32, hidden=32, output_dim=4.
    B, T, E, H, O = 2, 8, 32, 32, 4
    key = jax.random.PRNGKey(0)
    k_doc, k_params = jax.random.split(key)

    doc = jax.random.normal(k_doc, (B, T, E), jnp.float32)   # [batch, doc_len, embed_dim]
    params = init_params(k_params, E, H, O)

    out = recurnet_forward(doc, params)
    out = jax.block_until_ready(out)

    assert out.shape == (B, O)
    # softmax rows sum to 1 (softmax is computed in f32 in-kernel)
    assert bool(jnp.allclose(jnp.sum(out, axis=1), 1.0, atol=1e-5))
    # match the pure-JAX f32 LSTM reference (tolerance relaxed for bf16 MXU
    # operands and the tanh(x)=2*sigmoid(2x)-1 rewrite)
    ref = recurnet_reference(doc, params)
    assert bool(jnp.allclose(out, ref, atol=2e-2, rtol=2e-2))
    print("KERNEL_OK")
</pallas_src>

<mosaic_0001>
module attributes {stable_mosaic.version = 11 : i64} {
  func.func @recurnet_kernel(%arg0: memref<64x32xbf16, #tpu.memory_space<vmem>>, %arg1: memref<32x128xbf16, #tpu.memory_space<vmem>>, %arg2: memref<32x128xbf16, #tpu.memory_space<vmem>>, %arg3: memref<1x128xf32, #tpu.memory_space<vmem>>, %arg4: memref<32x128xbf16, #tpu.memory_space<vmem>>, %arg5: memref<1x128xf32, #tpu.memory_space<vmem>>, %arg6: memref<8x128xf32, #tpu.memory_space<vmem>>) attributes {dimension_semantics = [], scalar_prefetch = 0 : i64, scratch_operands = 0 : i64, tpu.core_type = #tpu.core_type<tc>} {
    %c0 = arith.constant 0 : index
    %c0_0 = arith.constant 0 : index
    %0 = vector.load %arg0[%c0, %c0_0] : memref<64x32xbf16, #tpu.memory_space<vmem>>, vector<64x32xbf16>
    %c0_1 = arith.constant 0 : index
    %c0_2 = arith.constant 0 : index
    %1 = vector.load %arg1[%c0_1, %c0_2] : memref<32x128xbf16, #tpu.memory_space<vmem>>, vector<32x128xbf16>
    %cst = arith.constant dense<0.000000e+00> : vector<64x128xf32>
    %2 = tpu.matmul %0, %1, %cst {dimension_numbers = #tpu.dot_dimension_numbers<[1], [0], [0], [1], [0, 0, 1, 1], [], []>} : vector<64x32xbf16>, vector<32x128xbf16>, vector<64x128xf32> -> vector<64x128xf32>
    %c0_3 = arith.constant 0 : index
    %c0_4 = arith.constant 0 : index
    %3 = vector.load %arg3[%c0_3, %c0_4] : memref<1x128xf32, #tpu.memory_space<vmem>>, vector<1x128xf32>
    %4 = vector.broadcast %3 : vector<1x128xf32> to vector<64x128xf32>
    %5 = arith.addf %2, %4 : vector<64x128xf32>
    %6 = tpu.iota {dimensions = array<i32: 1>} : vector<8x128xi32>
    %c64_i32 = arith.constant 64 : i32
    %7 = vector.broadcast %c64_i32 : i32 to vector<8x128xi32>
    %8 = arith.cmpi sge, %6, %7 : vector<8x128xi32>
    %c96_i32 = arith.constant 96 : i32
    %9 = vector.broadcast %c96_i32 : i32 to vector<8x128xi32>
    %10 = arith.cmpi slt, %6, %9 : vector<8x128xi32>
    %11 = arith.andi %8, %10 : vector<8x128xi1>
    %cst_5 = arith.constant 2.000000e+00 : f32
    %cst_6 = arith.constant 1.000000e+00 : f32
    %12 = vector.broadcast %cst_5 : f32 to vector<8x128xf32>
    %13 = vector.broadcast %cst_6 : f32 to vector<8x128xf32>
    %14 = arith.select %11, %12, %13 : vector<8x128xi1>, vector<8x128xf32>
    %cst_7 = arith.constant -1.000000e+00 : f32
    %cst_8 = arith.constant 0.000000e+00 : f32
    %15 = vector.broadcast %cst_7 : f32 to vector<8x128xf32>
    %16 = vector.broadcast %cst_8 : f32 to vector<8x128xf32>
    %17 = arith.select %11, %15, %16 : vector<8x128xi1>, vector<8x128xf32>
    %c0_9 = arith.constant 0 : index
    %c0_10 = arith.constant 0 : index
    %18 = vector.load %arg2[%c0_9, %c0_10] : memref<32x128xbf16, #tpu.memory_space<vmem>>, vector<32x128xbf16>
    %cst_11 = arith.constant 0.000000e+00 : f32
    %19 = vector.broadcast %cst_11 : f32 to vector<8x32xf32>
    %cst_12 = arith.constant 0.000000e+00 : f32
    %20 = vector.broadcast %cst_12 : f32 to vector<8x32xf32>
    %21 = vector.extract_strided_slice %5 {offsets = [0, 0], sizes = [8, 128], strides = [1, 1]} : vector<64x128xf32> to vector<8x128xf32>
    %22 = arith.truncf %19 : vector<8x32xf32> to vector<8x32xbf16>
    %cst_13 = arith.constant dense<0.000000e+00> : vector<8x128xf32>
    %23 = tpu.matmul %22, %18, %cst_13 {dimension_numbers = #tpu.dot_dimension_numbers<[1], [0], [0], [1], [0, 0, 1, 1], [], []>} : vector<8x32xbf16>, vector<32x128xbf16>, vector<8x128xf32> -> vector<8x128xf32>
    %24 = arith.addf %21, %23 : vector<8x128xf32>
    %25 = arith.mulf %24, %14 : vector<8x128xf32>
    %26 = arith.negf %25 : vector<8x128xf32>
    %27 = math.exp %26 : vector<8x128xf32>
    %cst_14 = arith.constant 1.000000e+00 : f32
    %28 = vector.broadcast %cst_14 : f32 to vector<8x128xf32>
    %29 = arith.addf %28, %27 : vector<8x128xf32>
    %30 = arith.divf %28, %29 : vector<8x128xf32>
    %31 = arith.mulf %30, %14 : vector<8x128xf32>
    %32 = arith.addf %31, %17 : vector<8x128xf32>
    %33 = vector.extract_strided_slice %32 {offsets = [0, 0], sizes = [8, 32], strides = [1, 1]} : vector<8x128xf32> to vector<8x32xf32>
    %34 = vector.extract_strided_slice %32 {offsets = [0, 32], sizes = [8, 32], strides = [1, 1]} : vector<8x128xf32> to vector<8x32xf32>
    %35 = vector.extract_strided_slice %32 {offsets = [0, 64], sizes = [8, 32], strides = [1, 1]} : vector<8x128xf32> to vector<8x32xf32>
    %36 = vector.extract_strided_slice %32 {offsets = [0, 96], sizes = [8, 32], strides = [1, 1]} : vector<8x128xf32> to vector<8x32xf32>
    %37 = arith.mulf %33, %20 : vector<8x32xf32>
    %38 = arith.mulf %34, %35 : vector<8x32xf32>
    %39 = arith.addf %37, %38 : vector<8x32xf32>
    %40 = math.tanh %39 : vector<8x32xf32>
    %41 = arith.mulf %36, %40 : vector<8x32xf32>
    %42 = vector.extract_strided_slice %5 {offsets = [8, 0], sizes = [8, 128], strides = [1, 1]} : vector<64x128xf32> to vector<8x128xf32>
    %43 = arith.truncf %41 : vector<8x32xf32> to vector<8x32xbf16>
    %cst_15 = arith.constant dense<0.000000e+00> : vector<8x128xf32>
    %44 = tpu.matmul %43, %18, %cst_15 {dimension_numbers = #tpu.dot_dimension_numbers<[1], [0], [0], [1], [0, 0, 1, 1], [], []>} : vector<8x32xbf16>, vector<32x128xbf16>, vector<8x128xf32> -> vector<8x128xf32>
    %45 = arith.addf %42, %44 : vector<8x128xf32>
    %46 = arith.mulf %45, %14 : vector<8x128xf32>
    %47 = arith.negf %46 : vector<8x128xf32>
    %48 = math.exp %47 : vector<8x128xf32>
    %cst_16 = arith.constant 1.000000e+00 : f32
    %49 = vector.broadcast %cst_16 : f32 to vector<8x128xf32>
    %50 = arith.addf %49, %48 : vector<8x128xf32>
    %51 = arith.divf %49, %50 : vector<8x128xf32>
    %52 = arith.mulf %51, %14 : vector<8x128xf32>
    %53 = arith.addf %52, %17 : vector<8x128xf32>
    %54 = vector.extract_strided_slice %53 {offsets = [0, 0], sizes = [8, 32], strides = [1, 1]} : vector<8x128xf32> to vector<8x32xf32>
    %55 = vector.extract_strided_slice %53 {offsets = [0, 32], sizes = [8, 32], strides = [1, 1]} : vector<8x128xf32> to vector<8x32xf32>
    %56 = vector.extract_strided_slice %53 {offsets = [0, 64], sizes = [8, 32], strides = [1, 1]} : vector<8x128xf32> to vector<8x32xf32>
    %57 = vector.extract_strided_slice %53 {offsets = [0, 96], sizes = [8, 32], strides = [1, 1]} : vector<8x128xf32> to vector<8x32xf32>
    %58 = arith.mulf %54, %39 : vector<8x32xf32>
    %59 = arith.mulf %55, %56 : vector<8x32xf32>
    %60 = arith.addf %58, %59 : vector<8x32xf32>
    %61 = math.tanh %60 : vector<8x32xf32>
    %62 = arith.mulf %57, %61 : vector<8x32xf32>
    %63 = vector.extract_strided_slice %5 {offsets = [16, 0], sizes = [8, 128], strides = [1, 1]} : vector<64x128xf32> to vector<8x128xf32>
    %64 = arith.truncf %62 : vector<8x32xf32> to vector<8x32xbf16>
    %cst_17 = arith.constant dense<0.000000e+00> : vector<8x128xf32>
    %65 = tpu.matmul %64, %18, %cst_17 {dimension_numbers = #tpu.dot_dimension_numbers<[1], [0], [0], [1], [0, 0, 1, 1], [], []>} : vector<8x32xbf16>, vector<32x128xbf16>, vector<8x128xf32> -> vector<8x128xf32>
    %66 = arith.addf %63, %65 : vector<8x128xf32>
    %67 = arith.mulf %66, %14 : vector<8x128xf32>
    %68 = arith.negf %67 : vector<8x128xf32>
    %69 = math.exp %68 : vector<8x128xf32>
    %cst_18 = arith.constant 1.000000e+00 : f32
    %70 = vector.broadcast %cst_18 : f32 to vector<8x128xf32>
    %71 = arith.addf %70, %69 : vector<8x128xf32>
    %72 = arith.divf %70, %71 : vector<8x128xf32>
    %73 = arith.mulf %72, %14 : vector<8x128xf32>
    %74 = arith.addf %73, %17 : vector<8x128xf32>
    %75 = vector.extract_strided_slice %74 {offsets = [0, 0], sizes = [8, 32], strides = [1, 1]} : vector<8x128xf32> to vector<8x32xf32>
    %76 = vector.extract_strided_slice %74 {offsets = [0, 32], sizes = [8, 32], strides = [1, 1]} : vector<8x128xf32> to vector<8x32xf32>
    %77 = vector.extract_strided_slice %74 {offsets = [0, 64], sizes = [8, 32], strides = [1, 1]} : vector<8x128xf32> to vector<8x32xf32>
    %78 = vector.extract_strided_slice %74 {offsets = [0, 96], sizes = [8, 32], strides = [1, 1]} : vector<8x128xf32> to vector<8x32xf32>
    %79 = arith.mulf %75, %60 : vector<8x32xf32>
    %80 = arith.mulf %76, %77 : vector<8x32xf32>
    %81 = arith.addf %79, %80 : vector<8x32xf32>
    %82 = math.tanh %81 : vector<8x32xf32>
    %83 = arith.mulf %78, %82 : vector<8x32xf32>
    %84 = vector.extract_strided_slice %5 {offsets = [24, 0], sizes = [8, 128], strides = [1, 1]} : vector<64x128xf32> to vector<8x128xf32>
    %85 = arith.truncf %83 : vector<8x32xf32> to vector<8x32xbf16>
    %cst_19 = arith.constant dense<0.000000e+00> : vector<8x128xf32>
    %86 = tpu.matmul %85, %18, %cst_19 {dimension_numbers = #tpu.dot_dimension_numbers<[1], [0], [0], [1], [0, 0, 1, 1], [], []>} : vector<8x32xbf16>, vector<32x128xbf16>, vector<8x128xf32> -> vector<8x128xf32>
    %87 = arith.addf %84, %86 : vector<8x128xf32>
    %88 = arith.mulf %87, %14 : vector<8x128xf32>
    %89 = arith.negf %88 : vector<8x128xf32>
    %90 = math.exp %89 : vector<8x128xf32>
    %cst_20 = arith.constant 1.000000e+00 : f32
    %91 = vector.broadcast %cst_20 : f32 to vector<8x128xf32>
    %92 = arith.addf %91, %90 : vector<8x128xf32>
    %93 = arith.divf %91, %92 : vector<8x128xf32>
    %94 = arith.mulf %93, %14 : vector<8x128xf32>
    %95 = arith.addf %94, %17 : vector<8x128xf32>
    %96 = vector.extract_strided_slice %95 {offsets = [0, 0], sizes = [8, 32], strides = [1, 1]} : vector<8x128xf32> to vector<8x32xf32>
    %97 = vector.extract_strided_slice %95 {offsets = [0, 32], sizes = [8, 32], strides = [1, 1]} : vector<8x128xf32> to vector<8x32xf32>
    %98 = vector.extract_strided_slice %95 {offsets = [0, 64], sizes = [8, 32], strides = [1, 1]} : vector<8x128xf32> to vector<8x32xf32>
    %99 = vector.extract_strided_slice %95 {offsets = [0, 96], sizes = [8, 32], strides = [1, 1]} : vector<8x128xf32> to vector<8x32xf32>
    %100 = arith.mulf %96, %81 : vector<8x32xf32>
    %101 = arith.mulf %97, %98 : vector<8x32xf32>
    %102 = arith.addf %100, %101 : vector<8x32xf32>
    %103 = math.tanh %102 : vector<8x32xf32>
    %104 = arith.mulf %99, %103 : vector<8x32xf32>
    %105 = vector.extract_strided_slice %5 {offsets = [32, 0], sizes = [8, 128], strides = [1, 1]} : vector<64x128xf32> to vector<8x128xf32>
    %106 = arith.truncf %104 : vector<8x32xf32> to vector<8x32xbf16>
    %cst_21 = arith.constant dense<0.000000e+00> : vector<8x128xf32>
    %107 = tpu.matmul %106, %18, %cst_21 {dimension_numbers = #tpu.dot_dimension_numbers<[1], [0], [0], [1], [0, 0, 1, 1], [], []>} : vector<8x32xbf16>, vector<32x128xbf16>, vector<8x128xf32> -> vector<8x128xf32>
    %108 = arith.addf %105, %107 : vector<8x128xf32>
    %109 = arith.mulf %108, %14 : vector<8x128xf32>
    %110 = arith.negf %109 : vector<8x128xf32>
    %111 = math.exp %110 : vector<8x128xf32>
    %cst_22 = arith.constant 1.000000e+00 : f32
    %112 = vector.broadcast %cst_22 : f32 to vector<8x128xf32>
    %113 = arith.addf %112, %111 : vector<8x128xf32>
    %114 = arith.divf %112, %113 : vector<8x128xf32>
    %115 = arith.mulf %114, %14 : vector<8x128xf32>
    %116 = arith.addf %115, %17 : vector<8x128xf32>
    %117 = vector.extract_strided_slice %116 {offsets = [0, 0], sizes = [8, 32], strides = [1, 1]} : vector<8x128xf32> to vector<8x32xf32>
    %118 = vector.extract_strided_slice %116 {offsets = [0, 32], sizes = [8, 32], strides = [1, 1]} : vector<8x128xf32> to vector<8x32xf32>
    %119 = vector.extract_strided_slice %116 {offsets = [0, 64], sizes = [8, 32], strides = [1, 1]} : vector<8x128xf32> to vector<8x32xf32>
    %120 = vector.extract_strided_slice %116 {offsets = [0, 96], sizes = [8, 32], strides = [1, 1]} : vector<8x128xf32> to vector<8x32xf32>
    %121 = arith.mulf %117, %102 : vector<8x32xf32>
    %122 = arith.mulf %118, %119 : vector<8x32xf32>
    %123 = arith.addf %121, %122 : vector<8x32xf32>
    %124 = math.tanh %123 : vector<8x32xf32>
    %125 = arith.mulf %120, %124 : vector<8x32xf32>
    %126 = vector.extract_strided_slice %5 {offsets = [40, 0], sizes = [8, 128], strides = [1, 1]} : vector<64x128xf32> to vector<8x128xf32>
    %127 = arith.truncf %125 : vector<8x32xf32> to vector<8x32xbf16>
    %cst_23 = arith.constant dense<0.000000e+00> : vector<8x128xf32>
    %128 = tpu.matmul %127, %18, %cst_23 {dimension_numbers = #tpu.dot_dimension_numbers<[1], [0], [0], [1], [0, 0, 1, 1], [], []>} : vector<8x32xbf16>, vector<32x128xbf16>, vector<8x128xf32> -> vector<8x128xf32>
    %129 = arith.addf %126, %128 : vector<8x128xf32>
    %130 = arith.mulf %129, %14 : vector<8x128xf32>
    %131 = arith.negf %130 : vector<8x128xf32>
    %132 = math.exp %131 : vector<8x128xf32>
    %cst_24 = arith.constant 1.000000e+00 : f32
    %133 = vector.broadcast %cst_24 : f32 to vector<8x128xf32>
    %134 = arith.addf %133, %132 : vector<8x128xf32>
    %135 = arith.divf %133, %134 : vector<8x128xf32>
    %136 = arith.mulf %135, %14 : vector<8x128xf32>
    %137 = arith.addf %136, %17 : vector<8x128xf32>
    %138 = vector.extract_strided_slice %137 {offsets = [0, 0], sizes = [8, 32], strides = [1, 1]} : vector<8x128xf32> to vector<8x32xf32>
    %139 = vector.extract_strided_slice %137 {offsets = [0, 32], sizes = [8, 32], strides = [1, 1]} : vector<8x128xf32> to vector<8x32xf32>
    %140 = vector.extract_strided_slice %137 {offsets = [0, 64], sizes = [8, 32], strides = [1, 1]} : vector<8x128xf32> to vector<8x32xf32>
    %141 = vector.extract_strided_slice %137 {offsets = [0, 96], sizes = [8, 32], strides = [1, 1]} : vector<8x128xf32> to vector<8x32xf32>
    %142 = arith.mulf %138, %123 : vector<8x32xf32>
    %143 = arith.mulf %139, %140 : vector<8x32xf32>
    %144 = arith.addf %142, %143 : vector<8x32xf32>
    %145 = math.tanh %144 : vector<8x32xf32>
    %146 = arith.mulf %141, %145 : vector<8x32xf32>
    %147 = vector.extract_strided_slice %5 {offsets = [48, 0], sizes = [8, 128], strides = [1, 1]} : vector<64x128xf32> to vector<8x128xf32>
    %148 = arith.truncf %146 : vector<8x32xf32> to vector<8x32xbf16>
    %cst_25 = arith.constant dense<0.000000e+00> : vector<8x128xf32>
    %149 = tpu.matmul %148, %18, %cst_25 {dimension_numbers = #tpu.dot_dimension_numbers<[1], [0], [0], [1], [0, 0, 1, 1], [], []>} : vector<8x32xbf16>, vector<32x128xbf16>, vector<8x128xf32> -> vector<8x128xf32>
    %150 = arith.addf %147, %149 : vector<8x128xf32>
    %151 = arith.mulf %150, %14 : vector<8x128xf32>
    %152 = arith.negf %151 : vector<8x128xf32>
    %153 = math.exp %152 : vector<8x128xf32>
    %cst_26 = arith.constant 1.000000e+00 : f32
    %154 = vector.broadcast %cst_26 : f32 to vector<8x128xf32>
    %155 = arith.addf %154, %153 : vector<8x128xf32>
    %156 = arith.divf %154, %155 : vector<8x128xf32>
    %157 = arith.mulf %156, %14 : vector<8x128xf32>
    %158 = arith.addf %157, %17 : vector<8x128xf32>
    %159 = vector.extract_strided_slice %158 {offsets = [0, 0], sizes = [8, 32], strides = [1, 1]} : vector<8x128xf32> to vector<8x32xf32>
    %160 = vector.extract_strided_slice %158 {offsets = [0, 32], sizes = [8, 32], strides = [1, 1]} : vector<8x128xf32> to vector<8x32xf32>
    %161 = vector.extract_strided_slice %158 {offsets = [0, 64], sizes = [8, 32], strides = [1, 1]} : vector<8x128xf32> to vector<8x32xf32>
    %162 = vector.extract_strided_slice %158 {offsets = [0, 96], sizes = [8, 32], strides = [1, 1]} : vector<8x128xf32> to vector<8x32xf32>
    %163 = arith.mulf %159, %144 : vector<8x32xf32>
    %164 = arith.mulf %160, %161 : vector<8x32xf32>
    %165 = arith.addf %163, %164 : vector<8x32xf32>
    %166 = math.tanh %165 : vector<8x32xf32>
    %167 = arith.mulf %162, %166 : vector<8x32xf32>
    %168 = vector.extract_strided_slice %5 {offsets = [56, 0], sizes = [8, 128], strides = [1, 1]} : vector<64x128xf32> to vector<8x128xf32>
    %169 = arith.truncf %167 : vector<8x32xf32> to vector<8x32xbf16>
    %cst_27 = arith.constant dense<0.000000e+00> : vector<8x128xf32>
    %170 = tpu.matmul %169, %18, %cst_27 {dimension_numbers = #tpu.dot_dimension_numbers<[1], [0], [0], [1], [0, 0, 1, 1], [], []>} : vector<8x32xbf16>, vector<32x128xbf16>, vector<8x128xf32> -> vector<8x128xf32>
    %171 = arith.addf %168, %170 : vector<8x128xf32>
    %172 = arith.mulf %171, %14 : vector<8x128xf32>
    %173 = arith.negf %172 : vector<8x128xf32>
    %174 = math.exp %173 : vector<8x128xf32>
    %cst_28 = arith.constant 1.000000e+00 : f32
    %175 = vector.broadcast %cst_28 : f32 to vector<8x128xf32>
    %176 = arith.addf %175, %174 : vector<8x128xf32>
    %177 = arith.divf %175, %176 : vector<8x128xf32>
    %178 = arith.mulf %177, %14 : vector<8x128xf32>
    %179 = arith.addf %178, %17 : vector<8x128xf32>
    %180 = vector.extract_strided_slice %179 {offsets = [0, 0], sizes = [8, 32], strides = [1, 1]} : vector<8x128xf32> to vector<8x32xf32>
    %181 = vector.extract_strided_slice %179 {offsets = [0, 32], sizes = [8, 32], strides = [1, 1]} : vector<8x128xf32> to vector<8x32xf32>
    %182 = vector.extract_strided_slice %179 {offsets = [0, 64], sizes = [8, 32], strides = [1, 1]} : vector<8x128xf32> to vector<8x32xf32>
    %183 = vector.extract_strided_slice %179 {offsets = [0, 96], sizes = [8, 32], strides = [1, 1]} : vector<8x128xf32> to vector<8x32xf32>
    %184 = arith.mulf %180, %165 : vector<8x32xf32>
    %185 = arith.mulf %181, %182 : vector<8x32xf32>
    %186 = arith.addf %184, %185 : vector<8x32xf32>
    %187 = math.tanh %186 : vector<8x32xf32>
    %188 = arith.mulf %183, %187 : vector<8x32xf32>
    %189 = arith.truncf %188 : vector<8x32xf32> to vector<8x32xbf16>
    %c0_29 = arith.constant 0 : index
    %c0_30 = arith.constant 0 : index
    %190 = vector.load %arg4[%c0_29, %c0_30] : memref<32x128xbf16, #tpu.memory_space<vmem>>, vector<32x128xbf16>
    %cst_31 = arith.constant dense<0.000000e+00> : vector<8x128xf32>
    %191 = tpu.matmul %189, %190, %cst_31 {dimension_numbers = #tpu.dot_dimension_numbers<[1], [0], [0], [1], [0, 0, 1, 1], [], []>} : vector<8x32xbf16>, vector<32x128xbf16>, vector<8x128xf32> -> vector<8x128xf32>
    %c0_32 = arith.constant 0 : index
    %c0_33 = arith.constant 0 : index
    %192 = vector.load %arg5[%c0_32, %c0_33] : memref<1x128xf32, #tpu.memory_space<vmem>>, vector<1x128xf32>
    %193 = vector.broadcast %192 : vector<1x128xf32> to vector<8x128xf32>
    %194 = arith.addf %191, %193 : vector<8x128xf32>
    %cst_34 = arith.constant dense<0xFF800000> : vector<8xf32>
    %195 = vector.multi_reduction <maximumf>, %194, %cst_34 [1] : vector<8x128xf32> to vector<8xf32>
    %196 = vector.shape_cast %195 : vector<8xf32> to vector<8x1xf32>
    %197 = vector.broadcast %196 : vector<8x1xf32> to vector<8x128xf32>
    %198 = arith.subf %194, %197 : vector<8x128xf32>
    %199 = math.exp %198 : vector<8x128xf32>
    %cst_35 = arith.constant dense<0.000000e+00> : vector<8xf32>
    %200 = vector.multi_reduction <add>, %199, %cst_35 [1] : vector<8x128xf32> to vector<8xf32>
    %201 = vector.shape_cast %200 : vector<8xf32> to vector<8x1xf32>
    %202 = vector.broadcast %201 : vector<8x1xf32> to vector<8x128xf32>
    %203 = arith.divf %199, %202 : vector<8x128xf32>
    %c0_36 = arith.constant 0 : index
    %c0_37 = arith.constant 0 : index
    %204 = vector.load %arg6[%c0_36, %c0_37] : memref<8x128xf32, #tpu.memory_space<vmem>>, vector<8x128xf32>
    tpu.vector_store %arg6[%c0_36, %c0_37], %203 {strides = array<i32>} : memref<8x128xf32, #tpu.memory_space<vmem>>, vector<8x128xf32>,
    return
  }
}

</mosaic_0001>

<llo_original>
// kernel: recurnet_forward.1
$region0: #{recurnet_forward.1}
  #allocation0 [shape = 'u32[]', space=smem, size = 0x4, offset = 0x4, fixed_abs, tag = 'smem constant byte address 0x4 - core index']
  #allocation1 [shape = 'u32[72,128]{1,0:T(1,128)}', space=vmem, size = 0x9000, scoped, tag = 'internal scratch']
  %s0 = inlined_call_operand.vmem [shape: bf16[64,32], index: 0, kind: input, shape index: {}]
  %s1 = inlined_call_operand.vmem [shape: bf16[32,128], index: 1, kind: input, shape index: {}]
  %s2 = inlined_call_operand.vmem [shape: bf16[32,128], index: 2, kind: input, shape index: {}]
  %s3 = inlined_call_operand.vmem [shape: f32[1,128], index: 3, kind: input, shape index: {}]
  %s4 = inlined_call_operand.vmem [shape: bf16[32,128], index: 4, kind: input, shape index: {}]
  %s5 = inlined_call_operand.vmem [shape: f32[1,128], index: 5, kind: input, shape index: {}]
  %s6 = inlined_call_operand.vmem [shape: f32[8,128], index: 6, kind: output, shape index: {}]
  %s7 = sld [smem:[#allocation0]]
  $region34: #{recurnet_forward.1} parent=0
    _
  %s9 = ssub.s32 1, %s7
  %s10 = scalar_select 0, %s9, %s7
  // Predicated region
  $region2: #{recurnet_forward.1} parent=0 // pred_check
    _
  $region3: #{recurnet_forward.1} parent=0 // pred_check_branch
    %12 = sbr.rel (0) target = $region5
  $region4: #{recurnet_forward.1} parent=0 // pred_region
    _
  $region5: #{recurnet_forward.1} parent=0 // pred_fallthru
    _
  // Predicated region
  $region6: #{recurnet_forward.1} parent=0 // pred_check
    _
  $region7: #{recurnet_forward.1} parent=0 // pred_check_branch
    %14 = sbr.rel (0) target = $region9
  $region8: #{recurnet_forward.1} parent=0 // pred_region
    _
  $region9: #{recurnet_forward.1} parent=0 // pred_fallthru
    _
  // Predicated region
  $region10: #{recurnet_forward.1} parent=0 // pred_check
    _
  $region11: #{recurnet_forward.1} parent=0 // pred_check_branch
    %16 = sbr.rel (0) target = $region13
  $region12: #{recurnet_forward.1} parent=0 // pred_region
    _
  $region13: #{recurnet_forward.1} parent=0 // pred_fallthru
    _
  // Predicated region
  $region14: #{recurnet_forward.1} parent=0 // pred_check
    _
  $region15: #{recurnet_forward.1} parent=0 // pred_check_branch
    %18 = sbr.rel (0) target = $region17
  $region16: #{recurnet_forward.1} parent=0 // pred_region
    _
  $region17: #{recurnet_forward.1} parent=0 // pred_fallthru
    _
  // Predicated region
  $region18: #{recurnet_forward.1} parent=0 // pred_check
    _
  $region19: #{recurnet_forward.1} parent=0 // pred_check_branch
    %20 = sbr.rel (0) target = $region21
  $region20: #{recurnet_forward.1} parent=0 // pred_region
    _
  $region21: #{recurnet_forward.1} parent=0 // pred_fallthru
    _
  // Predicated region
  $region22: #{recurnet_forward.1} parent=0 // pred_check
    _
  $region23: #{recurnet_forward.1} parent=0 // pred_check_branch
    %22 = sbr.rel (0) target = $region25
  $region24: #{recurnet_forward.1} parent=0 // pred_region
    _
  $region25: #{recurnet_forward.1} parent=0 // pred_fallthru
    _
  %v24 = vld [vmem:[%s0] sm:$0xf]
  %v25 = vld [vmem:[%s0 + $0x4] sm:$0xf]
  %v26 = vld [vmem:[%s0 + $0x8] sm:$0xf]
  %v27 = vld [vmem:[%s0 + $0xc] sm:$0xf]
  %v28 = vld [vmem:[%s0 + $0x10] sm:$0xf]
  %v29 = vld [vmem:[%s0 + $0x14] sm:$0xf]
  %v30 = vld [vmem:[%s0 + $0x18] sm:$0xf]
  %v31 = vld [vmem:[%s0 + $0x1c] sm:$0xf]
  %v32 = vld [vmem:[%s1] sm:$0xf]
  %v33 = vld [vmem:[%s1 + $0x4] sm:$0xf]
  %v34 = vld [vmem:[%s1 + $0x8] sm:$0xf]
  %v35 = vld [vmem:[%s1 + $0xc] sm:$0xf]
  %v36 = vld [vmem:[%s3] sm:$0x1]
  %v38 = vperm.slane %v36, 0
  %v48 = vunpack.c.l.b16 %v24
  %v49 = vunpack.c.l.b16 %v25
  %v50 = vunpack.c.l.b16 %v26
  %v51 = vunpack.c.l.b16 %v27
  %v52 = vunpack.c.l.b16 %v28
  %v53 = vunpack.c.l.b16 %v29
  %v54 = vunpack.c.l.b16 %v30
  %v55 = vunpack.c.l.b16 %v31
  %v56 = vpack.c.b16 %v49, %v48
  %v57 = vpack.c.b16 %v51, %v50
  %v58 = vpack.c.b16 %v53, %v52
  %v59 = vpack.c.b16 %v55, %v54
  %v64 = vunpack.c.l.b16 %v32
  %v65 = vunpack.c.l.b16 %v33
  %v66 = vunpack.c.l.b16 %v34
  %v67 = vunpack.c.l.b16 %v35
  %v68 = vpack.c.b16 %v65, %v64
  %v69 = vpack.c.b16 %v67, %v66
  %vm72 = vcmask 261120
  %v74 = vsel %vm72, %v56, 0
  %v77 = vsel %vm72, %v57, 0
  %v80 = vsel %vm72, %v58, 0
  %v83 = vsel %vm72, %v59, 0
  %85 = vmatpush.bf16.msra.mxu0 0
  %86 = vmatpush.bf16.msra.mxu0 0
  %87 = vmatpush.bf16.msra.mxu0 0
  %88 = vmatpush.bf16.msra.mxu0 0
  %89 = vmatpush.bf16.msra.mxu0 0
  %90 = vmatpush.bf16.msra.mxu0 0
  %91 = vmatpush.bf16.msra.mxu0 %v69
  %92 = vmatpush.bf16.msra.mxu0 %v68
  %93 = vmatmul.bf16.gmra.mxu0 %v74
  %v94 = vpop.f32.mrf.mxu0
  %v95 = vadd.f32 %v38, %v94
  %v96 = vpop.f32.mrf.mxu0
  %v97 = vadd.f32 %v38, %v96
  %98 = vmatmul.bf16.gmra.mxu0 %v77
  %v99 = vpop.f32.mrf.mxu0
  %v100 = vadd.f32 %v38, %v99
  %v101 = vpop.f32.mrf.mxu0
  %v102 = vadd.f32 %v38, %v101
  %103 = vmatmul.bf16.gmra.mxu0 %v80
  %v104 = vpop.f32.mrf.mxu0
  %v105 = vadd.f32 %v38, %v104
  %v106 = vpop.f32.mrf.mxu0
  %v107 = vadd.f32 %v38, %v106
  %108 = vmatmul.bf16.gmra.mxu0 %v83
  %v109 = vpop.f32.mrf.mxu0
  %v110 = vadd.f32 %v38, %v109
  %v111 = vpop.f32.mrf.mxu0
  %v112 = vadd.f32 %v38, %v111
  %113 = vdwg.mxu0
  %v114 = vlaneseq
  %v115 = vand.u32 %v114, 127
  %vm116 = vcmp.ge.s32.totalorder %v115, 64
  %vm117 = vcmp.lt.s32.totalorder %v115, 96
  %vm118 = vmand %vm116, %vm117
  %v119 = vsel %vm118, 2.0, 1.0
  %v120 = vsel %vm118, -1.0, 0.0
  %v121 = vld [vmem:[%s2] sm:$0xf]
  %v122 = vld [vmem:[%s2 + $0x4] sm:$0xf]
  %v123 = vld [vmem:[%s2 + $0x8] sm:$0xf]
  %v124 = vld [vmem:[%s2 + $0xc] sm:$0xf]
  %v129 = vunpack.c.l.b16 %v121
  %v130 = vunpack.c.l.b16 %v122
  %v131 = vunpack.c.l.b16 %v123
  %v132 = vunpack.c.l.b16 %v124
  %v133 = vpack.c.b16 %v130, %v129
  %v134 = vpack.c.b16 %v132, %v131
  %v138 = vsel %vm72, 0, 0
  %140 = vmatpush.bf16.msra.mxu0 0
  %141 = vmatpush.bf16.msra.mxu0 0
  %142 = vmatpush.bf16.msra.mxu0 0
  %143 = vmatpush.bf16.msra.mxu0 0
  %144 = vmatpush.bf16.msra.mxu0 0
  %145 = vmatpush.bf16.msra.mxu0 0
  %146 = vmatpush.bf16.msra.mxu0 %v134
  %147 = vmatpush.bf16.msra.mxu0 %v133
  %148 = vmatmul.bf16.gmra.mxu0 %v138
  %v149 = vpop.f32.mrf.mxu0
  %v150 = vadd.f32 0.0, %v149
  %v151 = vpop.f32.mrf.mxu0
  %152 = vdwg.mxu0
  %v153 = vadd.f32 %v95, %v150
  %v154 = vmul.f32 %v153, %v119
  %v155 = vxor.u32 %v154, 2147483648
  %v156 = vmul.f32 %v155, 1.442695
  %v157 = vpow.pop %v156
  %v158 = vadd.f32 %v157, 1.0
  %v159 = vrcp.pop %v158
  %v160 = vmul.f32 %v158, %v159
  %v161 = vsub.f32 1.0, %v160
  %v162 = vmul.f32 %v159, %v161
  %v163 = vadd.f32 %v159, %v162
  %vm164 = vweird.f32 %v158
  %vm165 = vweird.f32 %v159
  %vm166 = vmor %vm164, %vm165
  %v167 = vsel %vm166, %v159, %v163
  %v168 = vand.u32 2147483647, %v158
  %vm169 = vcmp.eq.f32.partialorder %v168, 8.507059e+37
  %v170 = vand.u32 %v158, 2147483648
  %v171 = vor.u32 1.1754944e-38, %v170
  %v172 = vsel %vm169, %v171, %v167
  %v173 = vmul.f32 1.0, %v172
  %v174 = vmul.f32 %v173, %v119
  %v175 = vadd.f32 %v174, %v120
  %v176 = vmul.f32 %v175, 0.0
  %178 = vrot.lane.b32.xlu0 %v175, 96
  %v179 = vpop.permute.xlu0 %178
  %v181 = vmul.f32 %v175, %v179
  %183 = vrot.lane.b32.xlu0 %v181, 96
  %v184 = vpop.permute.xlu0 %183
  %v186 = vadd.f32 %v176, %v184
  %v187 = vtanh.pop %v186
  %189 = vrot.lane.b32.xlu0 %v187, 96
  %v190 = vpop.permute.xlu0 %189
  %v192 = vmul.f32 %v175, %v190
  %v193 = vpack.c.bf16 %v192, %v192
  %195 = vrot.lane.b32.xlu0 %v193, 32
  %v196 = vpop.permute.xlu0 %195
  %v198 = vsel %vm72, %v196, 0
  %200 = vmatpush.bf16.msra.mxu0 0
  %201 = vmatpush.bf16.msra.mxu0 0
  %202 = vmatpush.bf16.msra.mxu0 0
  %203 = vmatpush.bf16.msra.mxu0 0
  %204 = vmatpush.bf16.msra.mxu0 0
  %205 = vmatpush.bf16.msra.mxu0 0
  %206 = vmatpush.bf16.msra.mxu0 %v134
  %207 = vmatpush.bf16.msra.mxu0 %v133
  %208 = vmatmul.bf16.gmra.mxu0 %v198
  %v209 = vpop.f32.mrf.mxu0
  %v210 = vadd.f32 0.0, %v209
  %v211 = vpop.f32.mrf.mxu0
  %212 = vdwg.mxu0
  %v213 = vadd.f32 %v97, %v210
  %v214 = vmul.f32 %v213, %v119
  %v215 = vxor.u32 %v214, 2147483648
  %v216 = vmul.f32 %v215, 1.442695
  %v217 = vpow.pop %v216
  %v218 = vadd.f32 %v217, 1.0
  %v219 = vrcp.pop %v218
  %v220 = vmul.f32 %v218, %v219
  %v221 = vsub.f32 1.0, %v220
  %v222 = vmul.f32 %v219, %v221
  %v223 = vadd.f32 %v219, %v222
  %vm224 = vweird.f32 %v218
  %vm225 = vweird.f32 %v219
  %vm226 = vmor %vm224, %vm225
  %v227 = vsel %vm226, %v219, %v223
  %v228 = vand.u32 2147483647, %v218
  %vm229 = vcmp.eq.f32.partialorder %v228, 8.507059e+37
  %v230 = vand.u32 %v218, 2147483648
  %v231 = vor.u32 1.1754944e-38, %v230
  %v232 = vsel %vm229, %v231, %v227
  %v233 = vmul.f32 1.0, %v232
  %v234 = vmul.f32 %v233, %v119
  %v235 = vadd.f32 %v234, %v120
  %v236 = vmul.f32 %v235, %v186
  %238 = vrot.lane.b32.xlu0 %v235, 96
  %v239 = vpop.permute.xlu0 %238
  %v241 = vmul.f32 %v235, %v239
  %243 = vrot.lane.b32.xlu0 %v241, 96
  %v244 = vpop.permute.xlu0 %243
  %v246 = vadd.f32 %v236, %v244
  %v247 = vtanh.pop %v246
  %249 = vrot.lane.b32.xlu0 %v247, 96
  %v250 = vpop.permute.xlu0 %249
  %v252 = vmul.f32 %v235, %v250
  %v253 = vpack.c.bf16 %v252, %v252
  %255 = vrot.lane.b32.xlu0 %v253, 32
  %v256 = vpop.permute.xlu0 %255
  %v258 = vsel %vm72, %v256, 0
  %260 = vmatpush.bf16.msra.mxu0 0
  %261 = vmatpush.bf16.msra.mxu0 0
  %262 = vmatpush.bf16.msra.mxu0 0
  %263 = vmatpush.bf16.msra.mxu0 0
  %264 = vmatpush.bf16.msra.mxu0 0
  %265 = vmatpush.bf16.msra.mxu0 0
  %266 = vmatpush.bf16.msra.mxu0 %v134
  %267 = vmatpush.bf16.msra.mxu0 %v133
  %268 = vmatmul.bf16.gmra.mxu0 %v258
  %v269 = vpop.f32.mrf.mxu0
  %v270 = vadd.f32 0.0, %v269
  %v271 = vpop.f32.mrf.mxu0
  %272 = vdwg.mxu0
  %v273 = vadd.f32 %v100, %v270
  %v274 = vmul.f32 %v273, %v119
  %v275 = vxor.u32 %v274, 2147483648
  %v276 = vmul.f32 %v275, 1.442695
  %v277 = vpow.pop %v276
  %v278 = vadd.f32 %v277, 1.0
  %v279 = vrcp.pop %v278
  %v280 = vmul.f32 %v278, %v279
  %v281 = vsub.f32 1.0, %v280
  %v282 = vmul.f32 %v279, %v281
  %v283 = vadd.f32 %v279, %v282
  %vm284 = vweird.f32 %v278
  %vm285 = vweird.f32 %v279
  %vm286 = vmor %vm284, %vm285
  %v287 = vsel %vm286, %v279, %v283
  %v288 = vand.u32 2147483647, %v278
  %vm289 = vcmp.eq.f32.partialorder %v288, 8.507059e+37
  %v290 = vand.u32 %v278, 2147483648
  %v291 = vor.u32 1.1754944e-38, %v290
  %v292 = vsel %vm289, %v291, %v287
  %v293 = vmul.f32 1.0, %v292
  %v294 = vmul.f32 %v293, %v119
  %v295 = vadd.f32 %v294, %v120
  %v296 = vmul.f32 %v295, %v246
  %298 = vrot.lane.b32.xlu0 %v295, 96
  %v299 = vpop.permute.xlu0 %298
  %v301 = vmul.f32 %v295, %v299
  %303 = vrot.lane.b32.xlu0 %v301, 96
  %v304 = vpop.permute.xlu0 %303
  %v306 = vadd.f32 %v296, %v304
  %v307 = vtanh.pop %v306
  %309 = vrot.lane.b32.xlu0 %v307, 96
  %v310 = vpop.permute.xlu0 %309
  %v312 = vmul.f32 %v295, %v310
  %v313 = vpack.c.bf16 %v312, %v312
  %315 = vrot.lane.b32.xlu0 %v313, 32
  %v316 = vpop.permute.xlu0 %315
  %v318 = vsel %vm72, %v316, 0
  %320 = vmatpush.bf16.msra.mxu0 0
  %321 = vmatpush.bf16.msra.mxu0 0
  %322 = vmatpush.bf16.msra.mxu0 0
  %323 = vmatpush.bf16.msra.mxu0 0
  %324 = vmatpush.bf16.msra.mxu0 0
  %325 = vmatpush.bf16.msra.mxu0 0
  %326 = vmatpush.bf16.msra.mxu0 %v134
  %327 = vmatpush.bf16.msra.mxu0 %v133
  %328 = vmatmul.bf16.gmra.mxu0 %v318
  %v329 = vpop.f32.mrf.mxu0
  %v330 = vadd.f32 0.0, %v329
  %v331 = vpop.f32.mrf.mxu0
  %332 = vdwg.mxu0
  %v333 = vadd.f32 %v102, %v330
  %v334 = vmul.f32 %v333, %v119
  %v335 = vxor.u32 %v334, 2147483648
  %v336 = vmul.f32 %v335, 1.442695
  %v337 = vpow.pop %v336
  %v338 = vadd.f32 %v337, 1.0
  %v339 = vrcp.pop %v338
  %v340 = vmul.f32 %v338, %v339
  %v341 = vsub.f32 1.0, %v340
  %v342 = vmul.f32 %v339, %v341
  %v343 = vadd.f32 %v339, %v342
  %vm344 = vweird.f32 %v338
  %vm345 = vweird.f32 %v339
  %vm346 = vmor %vm344, %vm345
  %v347 = vsel %vm346, %v339, %v343
  %v348 = vand.u32 2147483647, %v338
  %vm349 = vcmp.eq.f32.partialorder %v348, 8.507059e+37
  %v350 = vand.u32 %v338, 2147483648
  %v351 = vor.u32 1.1754944e-38, %v350
  %v352 = vsel %vm349, %v351, %v347
  %v353 = vmul.f32 1.0, %v352
  %v354 = vmul.f32 %v353, %v119
  %v355 = vadd.f32 %v354, %v120
  %v356 = vmul.f32 %v355, %v306
  %358 = vrot.lane.b32.xlu0 %v355, 96
  %v359 = vpop.permute.xlu0 %358
  %v361 = vmul.f32 %v355, %v359
  %363 = vrot.lane.b32.xlu0 %v361, 96
  %v364 = vpop.permute.xlu0 %363
  %v366 = vadd.f32 %v356, %v364
  %v367 = vtanh.pop %v366
  %369 = vrot.lane.b32.xlu0 %v367, 96
  %v370 = vpop.permute.xlu0 %369
  %v372 = vmul.f32 %v355, %v370
  %v373 = vpack.c.bf16 %v372, %v372
  %375 = vrot.lane.b32.xlu0 %v373, 32
  %v376 = vpop.permute.xlu0 %375
  %v378 = vsel %vm72, %v376, 0
  %380 = vmatpush.bf16.msra.mxu0 0
  %381 = vmatpush.bf16.msra.mxu0 0
  %382 = vmatpush.bf16.msra.mxu0 0
  %383 = vmatpush.bf16.msra.mxu0 0
  %384 = vmatpush.bf16.msra.mxu0 0
  %385 = vmatpush.bf16.msra.mxu0 0
  %386 = vmatpush.bf16.msra.mxu0 %v134
  %387 = vmatpush.bf16.msra.mxu0 %v133
  %388 = vmatmul.bf16.gmra.mxu0 %v378
  %v389 = vpop.f32.mrf.mxu0
  %v390 = vadd.f32 0.0, %v389
  %v391 = vpop.f32.mrf.mxu0
  %392 = vdwg.mxu0
  %v393 = vadd.f32 %v105, %v390
  %v394 = vmul.f32 %v393, %v119
  %v395 = vxor.u32 %v394, 2147483648
  %v396 = vmul.f32 %v395, 1.442695
  %v397 = vpow.pop %v396
  %v398 = vadd.f32 %v397, 1.0
  %v399 = vrcp.pop %v398
  %v400 = vmul.f32 %v398, %v399
  %v401 = vsub.f32 1.0, %v400
  %v402 = vmul.f32 %v399, %v401
  %v403 = vadd.f32 %v399, %v402
  %vm404 = vweird.f32 %v398
  %vm405 = vweird.f32 %v399
  %vm406 = vmor %vm404, %vm405
  %v407 = vsel %vm406, %v399, %v403
  %v408 = vand.u32 2147483647, %v398
  %vm409 = vcmp.eq.f32.partialorder %v408, 8.507059e+37
  %v410 = vand.u32 %v398, 2147483648
  %v411 = vor.u32 1.1754944e-38, %v410
  %v412 = vsel %vm409, %v411, %v407
  %v413 = vmul.f32 1.0, %v412
  %v414 = vmul.f32 %v413, %v119
  %v415 = vadd.f32 %v414, %v120
  %v416 = vmul.f32 %v415, %v366
  %418 = vrot.lane.b32.xlu0 %v415, 96
  %v419 = vpop.permute.xlu0 %418
  %v421 = vmul.f32 %v415, %v419
  %423 = vrot.lane.b32.xlu0 %v421, 96
  %v424 = vpop.permute.xlu0 %423
  %v426 = vadd.f32 %v416, %v424
  %v427 = vtanh.pop %v426
  %429 = vrot.lane.b32.xlu0 %v427, 96
  %v430 = vpop.permute.xlu0 %429
  %v432 = vmul.f32 %v415, %v430
  %v433 = vpack.c.bf16 %v432, %v432
  %435 = vrot.lane.b32.xlu0 %v433, 32
  %v436 = vpop.permute.xlu0 %435
  %v438 = vsel %vm72, %v436, 0
  %440 = vmatpush.bf16.msra.mxu0 0
  %441 = vmatpush.bf16.msra.mxu0 0
  %442 = vmatpush.bf16.msra.mxu0 0
  %443 = vmatpush.bf16.msra.mxu0 0
  %444 = vmatpush.bf16.msra.mxu0 0
  %445 = vmatpush.bf16.msra.mxu0 0
  %446 = vmatpush.bf16.msra.mxu0 %v134
  %447 = vmatpush.bf16.msra.mxu0 %v133
  %448 = vmatmul.bf16.gmra.mxu0 %v438
  %v449 = vpop.f32.mrf.mxu0
  %v450 = vadd.f32 0.0, %v449
  %v451 = vpop.f32.mrf.mxu0
  %452 = vdwg.mxu0
  %v453 = vadd.f32 %v107, %v450
  %v454 = vmul.f32 %v453, %v119
  %v455 = vxor.u32 %v454, 2147483648
  %v456 = vmul.f32 %v455, 1.442695
  %v457 = vpow.pop %v456
  %v458 = vadd.f32 %v457, 1.0
  %v459 = vrcp.pop %v458
  %v460 = vmul.f32 %v458, %v459
  %v461 = vsub.f32 1.0, %v460
  %v462 = vmul.f32 %v459, %v461
  %v463 = vadd.f32 %v459, %v462
  %vm464 = vweird.f32 %v458
  %vm465 = vweird.f32 %v459
  %vm466 = vmor %vm464, %vm465
  %v467 = vsel %vm466, %v459, %v463
  %v468 = vand.u32 2147483647, %v458
  %vm469 = vcmp.eq.f32.partialorder %v468, 8.507059e+37
  %v470 = vand.u32 %v458, 2147483648
  %v471 = vor.u32 1.1754944e-38, %v470
  %v472 = vsel %vm469, %v471, %v467
  %v473 = vmul.f32 1.0, %v472
  %v474 = vmul.f32 %v473, %v119
  %v475 = vadd.f32 %v474, %v120
  %v476 = vmul.f32 %v475, %v426
  %478 = vrot.lane.b32.xlu0 %v475, 96
  %v479 = vpop.permute.xlu0 %478
  %v481 = vmul.f32 %v475, %v479
  %483 = vrot.lane.b32.xlu0 %v481, 96
  %v484 = vpop.permute.xlu0 %483
  %v486 = vadd.f32 %v476, %v484
  %v487 = vtanh.pop %v486
  %489 = vrot.lane.b32.xlu0 %v487, 96
  %v490 = vpop.permute.xlu0 %489
  %v492 = vmul.f32 %v475, %v490
  %v493 = vpack.c.bf16 %v492, %v492
  %495 = vrot.lane.b32.xlu0 %v493, 32
  %v496 = vpop.permute.xlu0 %495
  %v498 = vsel %vm72, %v496, 0
  %500 = vmatpush.bf16.msra.mxu0 0
  %501 = vmatpush.bf16.msra.mxu0 0
  %502 = vmatpush.bf16.msra.mxu0 0
  %503 = vmatpush.bf16.msra.mxu0 0
  %504 = vmatpush.bf16.msra.mxu0 0
  %505 = vmatpush.bf16.msra.mxu0 0
  %506 = vmatpush.bf16.msra.mxu0 %v134
  %507 = vmatpush.bf16.msra.mxu0 %v133
  %508 = vmatmul.bf16.gmra.mxu0 %v498
  %v509 = vpop.f32.mrf.mxu0
  %v510 = vadd.f32 0.0, %v509
  %v511 = vpop.f32.mrf.mxu0
  %512 = vdwg.mxu0
  %v513 = vadd.f32 %v110, %v510
  %v514 = vmul.f32 %v513, %v119
  %v515 = vxor.u32 %v514, 2147483648
  %v516 = vmul.f32 %v515, 1.442695
  %v517 = vpow.pop %v516
  %v518 = vadd.f32 %v517, 1.0
  %v519 = vrcp.pop %v518
  %v520 = vmul.f32 %v518, %v519
  %v521 = vsub.f32 1.0, %v520
  %v522 = vmul.f32 %v519, %v521
  %v523 = vadd.f32 %v519, %v522
  %vm524 = vweird.f32 %v518
  %vm525 = vweird.f32 %v519
  %vm526 = vmor %vm524, %vm525
  %v527 = vsel %vm526, %v519, %v523
  %v528 = vand.u32 2147483647, %v518
  %vm529 = vcmp.eq.f32.partialorder %v528, 8.507059e+37
  %v530 = vand.u32 %v518, 2147483648
  %v531 = vor.u32 1.1754944e-38, %v530
  %v532 = vsel %vm529, %v531, %v527
  %v533 = vmul.f32 1.0, %v532
  %v534 = vmul.f32 %v533, %v119
  %v535 = vadd.f32 %v534, %v120
  %v536 = vmul.f32 %v535, %v486
  %538 = vrot.lane.b32.xlu0 %v535, 96
  %v539 = vpop.permute.xlu0 %538
  %v541 = vmul.f32 %v535, %v539
  %543 = vrot.lane.b32.xlu0 %v541, 96
  %v544 = vpop.permute.xlu0 %543
  %v546 = vadd.f32 %v536, %v544
  %v547 = vtanh.pop %v546
  %549 = vrot.lane.b32.xlu0 %v547, 96
  %v550 = vpop.permute.xlu0 %549
  %v552 = vmul.f32 %v535, %v550
  %v553 = vpack.c.bf16 %v552, %v552
  %555 = vrot.lane.b32.xlu0 %v553, 32
  %v556 = vpop.permute.xlu0 %555
  %v558 = vsel %vm72, %v556, 0
  %560 = vmatpush.bf16.msra.mxu0 0
  %561 = vmatpush.bf16.msra.mxu0 0
  %562 = vmatpush.bf16.msra.mxu0 0
  %563 = vmatpush.bf16.msra.mxu0 0
  %564 = vmatpush.bf16.msra.mxu0 0
  %565 = vmatpush.bf16.msra.mxu0 0
  %566 = vmatpush.bf16.msra.mxu0 %v134
  %567 = vmatpush.bf16.msra.mxu0 %v133
  %568 = vmatmul.bf16.gmra.mxu0 %v558
  %v569 = vpop.f32.mrf.mxu0
  %v570 = vadd.f32 0.0, %v569
  %v571 = vpop.f32.mrf.mxu0
  %572 = vdwg.mxu0
  %v573 = vadd.f32 %v112, %v570
  %v574 = vmul.f32 %v573, %v119
  %v575 = vxor.u32 %v574, 2147483648
  %v576 = vmul.f32 %v575, 1.442695
  %v577 = vpow.pop %v576
  %v578 = vadd.f32 %v577, 1.0
  %v579 = vrcp.pop %v578
  %v580 = vmul.f32 %v578, %v579
  %v581 = vsub.f32 1.0, %v580
  %v582 = vmul.f32 %v579, %v581
  %v583 = vadd.f32 %v579, %v582
  %vm584 = vweird.f32 %v578
  %vm585 = vweird.f32 %v579
  %vm586 = vmor %vm584, %vm585
  %v587 = vsel %vm586, %v579, %v583
  %v588 = vand.u32 2147483647, %v578
  %vm589 = vcmp.eq.f32.partialorder %v588, 8.507059e+37
  %v590 = vand.u32 %v578, 2147483648
  %v591 = vor.u32 1.1754944e-38, %v590
  %v592 = vsel %vm589, %v591, %v587
  %v593 = vmul.f32 1.0, %v592
  %v594 = vmul.f32 %v593, %v119
  %v595 = vadd.f32 %v594, %v120
  %v596 = vmul.f32 %v595, %v546
  %598 = vrot.lane.b32.xlu0 %v595, 96
  %v599 = vpop.permute.xlu0 %598
  %v601 = vmul.f32 %v595, %v599
  %603 = vrot.lane.b32.xlu0 %v601, 96
  %v604 = vpop.permute.xlu0 %603
  %v606 = vadd.f32 %v596, %v604
  %v607 = vtanh.pop %v606
  %609 = vrot.lane.b32.xlu0 %v607, 96
  %v610 = vpop.permute.xlu0 %609
  %v612 = vmul.f32 %v595, %v610
  %v613 = vpack.c.bf16 %v612, %v612
  %v614 = vld [vmem:[%s4] sm:$0xf]
  %v615 = vld [vmem:[%s4 + $0x4] sm:$0xf]
  %v616 = vld [vmem:[%s4 + $0x8] sm:$0xf]
  %v617 = vld [vmem:[%s4 + $0xc] sm:$0xf]
  %v618 = vld [vmem:[%s5] sm:$0x1]
  %v620 = vperm.slane %v618, 0
  %623 = vrot.lane.b32.xlu0 %v613, 32
  %v624 = vpop.permute.xlu0 %623
  %v629 = vunpack.c.l.b16 %v614
  %v630 = vunpack.c.l.b16 %v615
  %v631 = vunpack.c.l.b16 %v616
  %v632 = vunpack.c.l.b16 %v617
  %v633 = vpack.c.b16 %v630, %v629
  %v634 = vpack.c.b16 %v632, %v631
  %v638 = vsel %vm72, %v624, 0
  %640 = vmatpush.bf16.msra.mxu0 0
  %641 = vmatpush.bf16.msra.mxu0 0
  %642 = vmatpush.bf16.msra.mxu0 0
  %643 = vmatpush.bf16.msra.mxu0 0
  %644 = vmatpush.bf16.msra.mxu0 0
  %645 = vmatpush.bf16.msra.mxu0 0
  %646 = vmatpush.bf16.msra.mxu0 %v634
  %647 = vmatpush.bf16.msra.mxu0 %v633
  %648 = vmatmul.bf16.gmra.mxu0 %v638
  %v649 = vpop.f32.mrf.mxu0
  %v650 = vadd.f32 %v620, %v649
  %v651 = vpop.f32.mrf.mxu0
  %652 = vdwg.mxu0
  %653 = vmax.xlane.f32.xlu0 %v650
  %v654 = vpop.xlane.xlu0 %653
  %v655 = vsub.f32 %v650, %v654
  %v656 = vmul.f32 %v655, 1.442695
  %v657 = vpow.pop %v656
  %658 = vadd.xlane.f32.xlu0 %v657
  %v659 = vpop.xlane.xlu0 %658
  %v660 = vrcp.pop %v659
  %v661 = vmul.f32 %v659, %v660
  %v662 = vsub.f32 1.0, %v661
  %v663 = vmul.f32 %v660, %v662
  %v664 = vadd.f32 %v660, %v663
  %vm665 = vweird.f32 %v659
  %vm666 = vweird.f32 %v660
  %vm667 = vmor %vm665, %vm666
  %v668 = vsel %vm667, %v660, %v664
  %v669 = vand.u32 2147483647, %v659
  %vm670 = vcmp.eq.f32.partialorder %v669, 8.507059e+37
  %v671 = vand.u32 %v659, 2147483648
  %v672 = vor.u32 1.1754944e-38, %v671
  %v673 = vsel %vm670, %v672, %v668
  %v674 = vmul.f32 %v657, %v673
  %675 = vst [vmem:[%s6] sm:$0xff] %v674
  // Predicated region
  $region26: #{recurnet_forward.1} parent=0 // pred_check
    _
  $region27: #{recurnet_forward.1} parent=0 // pred_check_branch
    %677 = sbr.rel (0) target = $region29
  $region28: #{recurnet_forward.1} parent=0 // pred_region
    _
  $region29: #{recurnet_forward.1} parent=0 // pred_fallthru
    _
  // Predicated region
  $region30: #{recurnet_forward.1} parent=0 // pred_check
    _
  $region31: #{recurnet_forward.1} parent=0 // pred_check_branch
    %679 = sbr.rel (0) target = $region33
  $region32: #{recurnet_forward.1} parent=0 // pred_region
    _
  $region33: #{recurnet_forward.1} parent=0 // pred_fallthru
    _

</llo_original>
